<compile_context>
chip_gen: v5e
topology: v5e:2x2
jax: 0.10.0
libtpu: 0.0.40
codegen_flags: <defaults>
</compile_context>

<pallas_src>
import jax
import jax.numpy as jnp
import numpy as np
from jax.experimental import pallas as pl
from jax.experimental.pallas import tpu as pltpu

QUANTIZE = True          # sigma_to_t uses the quantized (argmin) path
CLIP_DENOISED = False    # matches module default


# ---------------------------------------------------------------------------
# Kernel: one (batch, spatial-tile) block per grid step.
#   scal_ref : SMEM (B, 3)  f32   [c_in, c_out, t] per batch (whole table)
#   x_ref    : VMEM (1, C, Ts)    input block
#   w1_ref   : VMEM (H_hid, C)    shared W1 (resident; constant index_map)
#   w2_ref   : VMEM (C, H_hid)    shared W2 (resident)
#   tw_ref   : VMEM (H_hid, 1)    shared time-embedding weight (resident)
#   o_ref    : VMEM (1, C, Ts)    output block
# ---------------------------------------------------------------------------
def _denoiser_kernel(scal_ref, x_ref, w1_ref, w2_ref, tw_ref, o_ref):
    b = pl.program_id(0)
    c_in = scal_ref[b, 0]
    c_out = scal_ref[b, 1]
    t = scal_ref[b, 2]

    x = x_ref[0].astype(jnp.float32)                               # (C, Ts)
    xs = x * c_in                                                  # scaled input

    # hidden = relu(W1 @ (c_in*x) + t*tw)   — single lane-dense 2-D matmul
    h = jnp.dot(w1_ref[...], xs, preferred_element_type=jnp.float32)   # (H_hid, Ts)
    h = jnp.maximum(h + t * tw_ref[...], 0.0)

    # eps = W2 @ hidden ; out = x + eps * c_out
    eps = jnp.dot(w2_ref[...], h, preferred_element_type=jnp.float32)  # (C, Ts)
    out = x + eps * c_out
    if CLIP_DENOISED:
        out = jnp.clip(out, -1.0, 1.0)
    o_ref[0] = out.astype(o_ref.dtype)


# ---------------------------------------------------------------------------
# Host-side helpers (hoisted per-batch scalar work)
# ---------------------------------------------------------------------------
def _sigma_to_t(sigma, log_sigmas, quantize=QUANTIZE):
    """Faithful port of DiscreteSchedule.sigma_to_t (both branches)."""
    log_sigma = jnp.log(sigma)
    dists = log_sigma[None, :] - log_sigmas[:, None]           # (N, B)
    if quantize:
        return jnp.argmin(jnp.abs(dists), axis=0).astype(jnp.float32)
    n = log_sigmas.shape[0]
    ge = (dists >= 0).astype(jnp.int32)
    low_idx = jnp.minimum(jnp.argmax(jnp.cumsum(ge, axis=0), axis=0), n - 2)
    high_idx = low_idx + 1
    low, high = log_sigmas[low_idx], log_sigmas[high_idx]
    w = jnp.clip((low - log_sigma) / (low - high), 0.0, 1.0)
    return ((1.0 - w) * low_idx + w * high_idx).astype(jnp.float32)


def _pick_spatial_tile(HW, C, H_hid, dtype_bytes=4,
                       vmem_budget=32 << 20, max_cols=2048):
    """Lane-dense spatial tile (multiple of 128 dividing HW) sized against a
    VMEM budget that counts double-buffered x in/out blocks plus the f32
    hidden/eps temporaries (the hidden temp dominates at H_hid >> C).
    Budget is conservative so the same tiling fits v7x (64 MiB physical)."""
    if HW % 128 != 0:
        return HW                       # full extent is always legal
    per_col = (2 * C + 2 * C + H_hid + C) * dtype_bytes
    budget_cols = max(128, (vmem_budget // per_col) // 128 * 128)
    ts = min(HW, max_cols, budget_cols)
    ts = max(128, (ts // 128) * 128)
    while HW % ts:                      # keep Ts a divisor of HW
        ts -= 128
    return max(ts, 128)


# ---------------------------------------------------------------------------
# Forward wrapper
# ---------------------------------------------------------------------------
def ddpm_denoiser_forward(x_nchw, sigma, log_sigmas, w1, w2, tw):
    B, C, H, W = x_nchw.shape
    HW = H * W
    H_hid = w1.shape[0]

    x = x_nchw.reshape(B, C, HW)                 # keep input dtype
    sigma = sigma.astype(jnp.float32)
    log_sigmas = log_sigmas.astype(jnp.float32)
    w1 = w1.astype(jnp.float32)
    w2 = w2.astype(jnp.float32)
    tw = tw.astype(jnp.float32)

    # --- hoisted per-batch scalar work (get_scalings + sigma_to_t) -----------
    c_in = 1.0 / jnp.sqrt(sigma * sigma + 1.0)   # sigma_data = 1.0
    c_out = -sigma
    t = _sigma_to_t(sigma, log_sigmas, QUANTIZE)
    scal = jnp.stack([c_in, c_out, t], axis=1)   # (B, 3) f32 scalar table -> SMEM

    Ts = _pick_spatial_tile(HW, C, H_hid)
    grid = (B, HW // Ts)

    out = pl.pallas_call(
        _denoiser_kernel,
        out_shape=jax.ShapeDtypeStruct((B, C, HW), x.dtype),
        grid=grid,
        in_specs=[
            pl.BlockSpec(memory_space=pltpu.MemorySpace.SMEM),        # per-batch scalars
            pl.BlockSpec((1, C, Ts), lambda b, s: (b, 0, s)),         # x block
            pl.BlockSpec((H_hid, C), lambda b, s: (0, 0)),            # W1 (resident)
            pl.BlockSpec((C, H_hid), lambda b, s: (0, 0)),            # W2 (resident)
            pl.BlockSpec((H_hid, 1), lambda b, s: (0, 0)),            # tw (resident)
        ],
        out_specs=pl.BlockSpec((1, C, Ts), lambda b, s: (b, 0, s)),
        compiler_params=pltpu.CompilerParams(
            dimension_semantics=("parallel", "parallel"),
            vmem_limit_bytes=48 * 1024 * 1024,   # fits v7x (64 MiB) and v5e/v6e
        ),
    )(scal, x, w1, w2, tw)
    return out.reshape(B, C, H, W)


# ---------------------------------------------------------------------------
# Pure-JAX reference mirroring the PyTorch module's computation order
# ---------------------------------------------------------------------------
def _ref_forward(x_nchw, sigma, log_sigmas, w1, w2, tw):
    B, C, H, W = x_nchw.shape
    x = x_nchw.reshape(B, C, H * W)
    c_in = 1.0 / jnp.sqrt(sigma ** 2 + 1.0)
    c_out = -sigma
    dists = jnp.abs(jnp.log(sigma)[:, None] - log_sigmas[None, :])
    t = jnp.argmin(dists, axis=1).astype(jnp.float32)
    xs = x * c_in[:, None, None]
    h = jnp.maximum(jnp.einsum('hc,bcs->bhs', w1, xs)
                    + t[:, None, None] * tw[None, :, :], 0.0)
    eps = jnp.einsum('ch,bhs->bcs', w2, h)
    out = x + eps * c_out[:, None, None]
    if CLIP_DENOISED:
        out = jnp.clip(out, -1.0, 1.0)
    return out.reshape(B, C, H, W)


if __name__ == "__main__":
    key = jax.random.PRNGKey(0)
    B, C, H, W = 2, 4, 16, 16
    N = 128        # number of discrete noise levels
    H_hid = 32

    k_x, k_s, k_w1, k_w2, k_tw = jax.random.split(key, 5)

    # DDPM-style schedule: alphas_cumprod from a linear beta schedule
    betas = jnp.linspace(1e-4, 2e-2, N, dtype=jnp.float32)
    alphas_cumprod = jnp.cumprod(1.0 - betas)
    sigmas = jnp.sqrt((1.0 - alphas_cumprod) / alphas_cumprod)   # buffer 'sigmas'
    log_sigmas = jnp.log(sigmas)                                 # buffer 'log_sigmas'

    x = jax.random.normal(k_x, (B, C, H, W), dtype=jnp.float32)
    sigma = jnp.exp(jax.random.uniform(
        k_s, (B,), minval=jnp.log(sigmas[0]), maxval=jnp.log(sigmas[-1]))).astype(jnp.float32)

    # deterministic synthetic inner_model parameters (eps predictor)
    # TODO(synk): the real inner_model is an arbitrary nn.Module; a per-pixel
    # channel MLP stands in for it here.
    w1 = (jax.random.normal(k_w1, (H_hid, C), dtype=jnp.float32) * 0.1)
    w2 = (jax.random.normal(k_w2, (C, H_hid), dtype=jnp.float32) * 0.1)
    tw = (jax.random.normal(k_tw, (H_hid, 1), dtype=jnp.float32) * 0.01)

    out = ddpm_denoiser_forward(x, sigma, log_sigmas, w1, w2, tw)
    out = jax.block_until_ready(out)

    ref = _ref_forward(x, sigma, log_sigmas, w1, w2, tw)
    np.testing.assert_allclose(np.asarray(out), np.asarray(ref), rtol=1e-5, atol=1e-5)
    print("KERNEL_OK")
</pallas_src>

<mosaic_0001>
module attributes {stable_mosaic.version = 11 : i64} {
  func.func @_denoiser_kernel(%arg0: i32, %arg1: i32, %arg2: memref<2x3xf32, #tpu.memory_space<smem>>, %arg3: memref<1x4x256xf32, #tpu.memory_space<vmem>>, %arg4: memref<32x4xf32, #tpu.memory_space<vmem>>, %arg5: memref<4x32xf32, #tpu.memory_space<vmem>>, %arg6: memref<32x1xf32, #tpu.memory_space<vmem>>, %arg7: memref<1x4x256xf32, #tpu.memory_space<vmem>>) attributes {dimension_semantics = [#tpu.dimension_semantics<parallel>, #tpu.dimension_semantics<parallel>], iteration_bounds = array<i64: 2, 1>, scalar_prefetch = 0 : i64, scratch_operands = 0 : i64, tpu.core_type = #tpu.core_type<tc>, window_params = [{transform_indices = @transform_0, window_bounds = array<i64: 2, 3>}, {transform_indices = @transform_1, window_bounds = array<i64: 1, 4, 256>}, {pipeline_mode = #tpu.pipeline_mode<synchronous>, transform_indices = @transform_2, window_bounds = array<i64: 32, 4>}, {pipeline_mode = #tpu.pipeline_mode<synchronous>, transform_indices = @transform_3, window_bounds = array<i64: 4, 32>}, {pipeline_mode = #tpu.pipeline_mode<synchronous>, transform_indices = @transform_4, window_bounds = array<i64: 32, 1>}, {transform_indices = @transform_5, window_bounds = array<i64: 1, 4, 256>}]} {
    %0 = arith.index_cast %arg0 : i32 to index
    %c0 = arith.constant 0 : index
    %1 = memref.load %arg2[%0, %c0] : memref<2x3xf32, #tpu.memory_space<smem>>
    %2 = arith.index_cast %arg0 : i32 to index
    %c1 = arith.constant 1 : index
    %3 = memref.load %arg2[%2, %c1] : memref<2x3xf32, #tpu.memory_space<smem>>
    %4 = arith.index_cast %arg0 : i32 to index
    %c2 = arith.constant 2 : index
    %5 = memref.load %arg2[%4, %c2] : memref<2x3xf32, #tpu.memory_space<smem>>
    %c0_0 = arith.constant 0 : index
    %c0_1 = arith.constant 0 : index
    %c0_2 = arith.constant 0 : index
    %6 = vector.load %arg3[%c0_0, %c0_1, %c0_2] : memref<1x4x256xf32, #tpu.memory_space<vmem>>, vector<1x4x256xf32>
    %7 = vector.shape_cast %6 : vector<1x4x256xf32> to vector<4x256xf32>
    %8 = vector.broadcast %1 : f32 to vector<4x256xf32>
    %9 = arith.mulf %7, %8 : vector<4x256xf32>
    %c0_3 = arith.constant 0 : index
    %c0_4 = arith.constant 0 : index
    %10 = vector.load %arg4[%c0_3, %c0_4] : memref<32x4xf32, #tpu.memory_space<vmem>>, vector<32x4xf32>
    %cst = arith.constant dense<0.000000e+00> : vector<32x256xf32>
    %11 = tpu.matmul %10, %9, %cst {dimension_numbers = #tpu.dot_dimension_numbers<[1], [0], [0], [1], [0, 0, 1, 1], [], []>} : vector<32x4xf32>, vector<4x256xf32>, vector<32x256xf32> -> vector<32x256xf32>
    %c0_5 = arith.constant 0 : index
    %c0_6 = arith.constant 0 : index
    %12 = vector.load %arg6[%c0_5, %c0_6] : memref<32x1xf32, #tpu.memory_space<vmem>>, vector<32x1xf32>
    %13 = vector.broadcast %5 : f32 to vector<32x1xf32>
    %14 = arith.mulf %13, %12 : vector<32x1xf32>
    %15 = vector.broadcast %14 : vector<32x1xf32> to vector<32x256xf32>
    %16 = arith.addf %11, %15 : vector<32x256xf32>
    %cst_7 = arith.constant 0.000000e+00 : f32
    %17 = vector.broadcast %cst_7 : f32 to vector<32x256xf32>
    %18 = arith.maximumf %16, %17 : vector<32x256xf32>
    %c0_8 = arith.constant 0 : index
    %c0_9 = arith.constant 0 : index
    %19 = vector.load %arg5[%c0_8, %c0_9] : memref<4x32xf32, #tpu.memory_space<vmem>>, vector<4x32xf32>
    %cst_10 = arith.constant dense<0.000000e+00> : vector<4x256xf32>
    %20 = tpu.matmul %19, %18, %cst_10 {dimension_numbers = #tpu.dot_dimension_numbers<[1], [0], [0], [1], [0, 0, 1, 1], [], []>} : vector<4x32xf32>, vector<32x256xf32>, vector<4x256xf32> -> vector<4x256xf32>
    %21 = vector.broadcast %3 : f32 to vector<4x256xf32>
    %22 = arith.mulf %20, %21 : vector<4x256xf32>
    %23 = arith.addf %7, %22 : vector<4x256xf32>
    %c0_11 = arith.constant 0 : index
    %c0_12 = arith.constant 0 : index
    %c0_13 = arith.constant 0 : index
    %24 = vector.load %arg7[%c0_11, %c0_12, %c0_13] : memref<1x4x256xf32, #tpu.memory_space<vmem>>, vector<1x4x256xf32>
    %25 = vector.shape_cast %24 : vector<1x4x256xf32> to vector<4x256xf32>
    %26 = vector.shape_cast %23 : vector<4x256xf32> to vector<1x4x256xf32>
    tpu.vector_store %arg7[%c0_11, %c0_12, %c0_13], %26 {strides = array<i32>} : memref<1x4x256xf32, #tpu.memory_space<vmem>>, vector<1x4x256xf32>,
    return
  }
  func.func @transform_0(%arg0: i32, %arg1: i32) -> (i32, i32) {
    %c0_i32 = arith.constant 0 : i32
    %c0_i32_0 = arith.constant 0 : i32
    %c0_i32_1 = arith.constant 0 : i32
    return %c0_i32, %c0_i32_0 : i32, i32
  }
  func.func @transform_1(%arg0: i32, %arg1: i32) -> (i32, i32, i32) {
    %c0_i32 = arith.constant 0 : i32
    %c0_i32_0 = arith.constant 0 : i32
    return %arg0, %c0_i32, %arg1 : i32, i32, i32
  }
  func.func @transform_2(%arg0: i32, %arg1: i32) -> (i32, i32) {
    %c0_i32 = arith.constant 0 : i32
    %c0_i32_0 = arith.constant 0 : i32
    %c0_i32_1 = arith.constant 0 : i32
    return %c0_i32, %c0_i32_0 : i32, i32
  }
  func.func @transform_3(%arg0: i32, %arg1: i32) -> (i32, i32) {
    %c0_i32 = arith.constant 0 : i32
    %c0_i32_0 = arith.constant 0 : i32
    %c0_i32_1 = arith.constant 0 : i32
    return %c0_i32, %c0_i32_0 : i32, i32
  }
  func.func @transform_4(%arg0: i32, %arg1: i32) -> (i32, i32) {
    %c0_i32 = arith.constant 0 : i32
    %c0_i32_0 = arith.constant 0 : i32
    %c0_i32_1 = arith.constant 0 : i32
    return %c0_i32, %c0_i32_0 : i32, i32
  }
  func.func @transform_5(%arg0: i32, %arg1: i32) -> (i32, i32, i32) {
    %c0_i32 = arith.constant 0 : i32
    %c0_i32_0 = arith.constant 0 : i32
    return %arg0, %c0_i32, %arg1 : i32, i32, i32
  }
}

</mosaic_0001>

<llo_original>
// kernel: tpu_custom_call.1
$region0: #{tpu_custom_call.1}
  #allocation0 [shape = 'u32[]', space=smem, size = 0x4, offset = 0x4, fixed_abs, tag = 'smem constant byte address 0x4 - core index']
  #allocation1 [shape = 'u32[72,128]{1,0:T(1,128)}', space=vmem, size = 0x9000, scoped, tag = 'internal scratch']
  %s0 = inlined_call_operand.vmem [shape: f32[2,3], index: 0, kind: input, shape index: {}]
  %s1 = inlined_call_operand.vmem [shape: f32[2,4,256], index: 1, kind: input, shape index: {}]
  %s2 = inlined_call_operand.vmem [shape: f32[32,4], index: 2, kind: input, shape index: {}]
  %s3 = inlined_call_operand.vmem [shape: f32[4,32], index: 3, kind: input, shape index: {}]
  %s4 = inlined_call_operand.vmem [shape: f32[32,1], index: 4, kind: input, shape index: {}]
  %s5 = inlined_call_operand.hbm [shape: f32[2,4,256], index: 5, kind: output, shape index: {}]
  %s6 = sld [smem:[#allocation0]]
  $region57: #{tpu_custom_call.1} parent=0
    _
  %s8 = ssub.s32 1, %s6
  %s9 = scalar_select 0, %s8, %s6
  $region1: #{tpu_custom_call.1} parent=0
    #allocation2 [shape = 'u8[1024]{0}', space=smem, size = 0x400, scoped, tag = 'input window, operand 0, single buffered']
    #allocation3 [shape = 's32[2]{0}', space=sflag, size = 0x8, scoped, tag = 'scoped memory for tpu_custom_call.1']
    #allocation4 [shape = 's32[2]{0}', space=sflag, size = 0x8, scoped, tag = 'scoped memory for tpu_custom_call.1']
    #allocation5 [shape = 'u8[8192]{0}', space=vmem, size = 0x2000, scoped, tag = 'output window, operand 0']
    %10 = vsyncpa [#allocation4], 0
    %11 = vsyncpa [#allocation3], 0
    %s12 = scalar_lea.sflag [#allocation3], 1
    %13 = vsyncpa %s12, 0
    loop: start=0, step=1, limit=4
    $region2: #{tpu_custom_call.1} parent=1 // loop_pre_header
      _
    $region3: #{tpu_custom_call.1} parent=1 // loop_header
      %s15 = sphi 0, %s19
      %p16 = scmp.ge.s32.totalorder %s15, 4
      %s22 = sphi 0, %s34
      %s23 = sphi 0, %s30
      %s24 = sphi 0, %s22
      %s25 = sphi 0, %s23
      %s26 = sphi 0, %s24
      %s27 = sphi 0, %s25
      %s35 = sphi 0, %s35
      %s37 = sphi 0, %s35
      %s38 = sphi 0, %s37
      %s52 = sphi 0, %s38
      %s60 = sphi 0, %s62
      %s63 = sphi 0, %s60
      %s64 = sphi 0, %s63
      %s80 = sphi 0, %s64
      %s84 = sphi 0, %s84
      %s86 = sphi 0, %s84
      %s87 = sphi 0, %s86
      %s101 = sphi 0, %s87
      %s105 = sphi 0, %s105
      %s107 = sphi 0, %s105
      %s108 = sphi 0, %s107
      %s122 = sphi 0, %s108
      %s126 = sphi 0, %s126
      %s128 = sphi 0, %s126
      %s129 = sphi 0, %s128
      %s143 = sphi 0, %s129
      %s151 = sphi 0, %s153
      %s154 = sphi 0, %s151
      %s155 = sphi 0, %s154
      %s171 = sphi 0, %s155
    $region4: #{tpu_custom_call.1} parent=1 // loop_header_branch
      %18 = sbr.rel (%p16) target = $region8
    $region5: #{tpu_custom_call.1} parent=1 // loop_body
      %s20 = ssub.s32 %s15, 1
      %s21 = ssub.s32 %s15, 2
      %s28 = sadd.s32 1, %s23
      %p29 = scmp.ge.s32.totalorder %s28, 1
      %s30 = scalar_select %p29, 0, %s28
      %s31 = sadd.s32 1, %s22
      %s32 = scalar_select %p29, %s31, %s22
      %p33 = scmp.ge.s32.totalorder %s32, 2
      %s34 = scalar_select %p33, 0, %s32
      %s36 = sadd.s32 %s35, 1
      %p39 = scmp.eq.s32.totalorder %s15, 1
      %p40 = scmp.ne.s32.totalorder %s35, %s37
      %p41 = scmp.eq.s32.totalorder %s15, 0
      %p42 = por %p40, %p41
      %p43 = scmp.ne.s32.totalorder %s35, %s37
      %p44 = scmp.eq.s32.totalorder %s20, 1
      %p45 = por %p43, %p44
      %p46 = scmp.ne.s32.totalorder %s37, %s38
      %p47 = scmp.eq.s32.totalorder %s20, 0
      %p48 = por %p46, %p47
      %p49 = scmp.ne.s32.totalorder %s37, %s38
      %p50 = scmp.eq.s32.totalorder %s21, 1
      %p51 = por %p49, %p50
      %p53 = scmp.ne.s32.totalorder %s38, %s52
      %p54 = scmp.eq.s32.totalorder %s21, 0
      %p55 = por %p53, %p54
      %s56 = ssub.s32 %s22, %s34
      %s57 = ssub.s32 %s23, %s30
      %s58 = sor.u32 %s56, %s57
      %p59 = scmp.eq.s32.totalorder %s58, 0
      %s61 = sadd.s32 %s60, 1
      %s62 = scalar_select %p59, %s60, %s61
      %p65 = pneg %p59
      %p66 = scmp.eq.s32.totalorder %s15, 1
      %p67 = por %p65, %p66
      %p68 = scmp.ne.s32.totalorder %s60, %s63
      %p69 = scmp.eq.s32.totalorder %s15, 0
      %p70 = por %p68, %p69
      %p71 = scmp.ne.s32.totalorder %s60, %s63
      %p72 = scmp.eq.s32.totalorder %s20, 1
      %p73 = por %p71, %p72
      %p74 = scmp.ne.s32.totalorder %s63, %s64
      %p75 = scmp.eq.s32.totalorder %s20, 0
      %p76 = por %p74, %p75
      %p77 = scmp.ne.s32.totalorder %s63, %s64
      %p78 = scmp.eq.s32.totalorder %s21, 1
      %p79 = por %p77, %p78
      %p81 = scmp.ne.s32.totalorder %s64, %s80
      %p82 = scmp.eq.s32.totalorder %s21, 0
      %p83 = por %p81, %p82
      %s85 = sadd.s32 %s84, 1
      %p88 = scmp.eq.s32.totalorder %s15, 1
      %p89 = scmp.ne.s32.totalorder %s84, %s86
      %p90 = scmp.eq.s32.totalorder %s15, 0
      %p91 = por %p89, %p90
      %p92 = scmp.ne.s32.totalorder %s84, %s86
      %p93 = scmp.eq.s32.totalorder %s20, 1
      %p94 = por %p92, %p93
      %p95 = scmp.ne.s32.totalorder %s86, %s87
      %p96 = scmp.eq.s32.totalorder %s20, 0
      %p97 = por %p95, %p96
      %p98 = scmp.ne.s32.totalorder %s86, %s87
      %p99 = scmp.eq.s32.totalorder %s21, 1
      %p100 = por %p98, %p99
      %p102 = scmp.ne.s32.totalorder %s87, %s101
      %p103 = scmp.eq.s32.totalorder %s21, 0
      %p104 = por %p102, %p103
      %s106 = sadd.s32 %s105, 1
      %p109 = scmp.eq.s32.totalorder %s15, 1
      %p110 = scmp.ne.s32.totalorder %s105, %s107
      %p111 = scmp.eq.s32.totalorder %s15, 0
      %p112 = por %p110, %p111
      %p113 = scmp.ne.s32.totalorder %s105, %s107
      %p114 = scmp.eq.s32.totalorder %s20, 1
      %p115 = por %p113, %p114
      %p116 = scmp.ne.s32.totalorder %s107, %s108
      %p117 = scmp.eq.s32.totalorder %s20, 0
      %p118 = por %p116, %p117
      %p119 = scmp.ne.s32.totalorder %s107, %s108
      %p120 = scmp.eq.s32.totalorder %s21, 1
      %p121 = por %p119, %p120
      %p123 = scmp.ne.s32.totalorder %s108, %s122
      %p124 = scmp.eq.s32.totalorder %s21, 0
      %p125 = por %p123, %p124
      %s127 = sadd.s32 %s126, 1
      %p130 = scmp.eq.s32.totalorder %s15, 1
      %p131 = scmp.ne.s32.totalorder %s126, %s128
      %p132 = scmp.eq.s32.totalorder %s15, 0
      %p133 = por %p131, %p132
      %p134 = scmp.ne.s32.totalorder %s126, %s128
      %p135 = scmp.eq.s32.totalorder %s20, 1
      %p136 = por %p134, %p135
      %p137 = scmp.ne.s32.totalorder %s128, %s129
      %p138 = scmp.eq.s32.totalorder %s20, 0
      %p139 = por %p137, %p138
      %p140 = scmp.ne.s32.totalorder %s128, %s129
      %p141 = scmp.eq.s32.totalorder %s21, 1
      %p142 = por %p140, %p141
      %p144 = scmp.ne.s32.totalorder %s129, %s143
      %p145 = scmp.eq.s32.totalorder %s21, 0
      %p146 = por %p144, %p145
      %s147 = ssub.s32 %s22, %s34
      %s148 = ssub.s32 %s23, %s30
      %s149 = sor.u32 %s147, %s148
      %p150 = scmp.eq.s32.totalorder %s149, 0
      %s152 = sadd.s32 %s151, 1
      %s153 = scalar_select %p150, %s151, %s152
      %p156 = pneg %p150
      %p157 = scmp.eq.s32.totalorder %s15, 1
      %p158 = por %p156, %p157
      %p159 = scmp.ne.s32.totalorder %s151, %s154
      %p160 = scmp.eq.s32.totalorder %s15, 0
      %p161 = por %p159, %p160
      %p162 = scmp.ne.s32.totalorder %s151, %s154
      %p163 = scmp.eq.s32.totalorder %s20, 1
      %p164 = por %p162, %p163
      %p165 = scmp.ne.s32.totalorder %s154, %s155
      %p166 = scmp.eq.s32.totalorder %s20, 0
      %p167 = por %p165, %p166
      %p168 = scmp.ne.s32.totalorder %s154, %s155
      %p169 = scmp.eq.s32.totalorder %s21, 1
      %p170 = por %p168, %p169
      %p172 = scmp.ne.s32.totalorder %s155, %s171
      %p173 = scmp.eq.s32.totalorder %s21, 0
      %p174 = por %p172, %p173
      %p175 = scmp.le.s32.totalorder 1, %s15
      %p176 = scmp.lt.s32.totalorder %s15, 3
      %p177 = pnand %p175, %p176
      %p178 = pneg %p177
      // Predicated region
      $region9: #{tpu_custom_call.1} parent=5 // pred_check
        _
      $region10: #{tpu_custom_call.1} parent=5 // pred_check_branch
        %180 = sbr.rel (%p177) target = $region12
      $region11: #{tpu_custom_call.1} parent=5 // pred_region
        %s181 = ssub.s32 %s15, 1
        // Predicated region
        $region13: #{tpu_custom_call.1} parent=11 // pred_check
          %p182 = pneg %p48
        $region14: #{tpu_custom_call.1} parent=11 // pred_check_branch
          %184 = sbr.rel (%p182) target = $region16
        $region15: #{tpu_custom_call.1} parent=11 // pred_region
          %186 = vsyncadd [#allocation4], 0
          %s188 = sshll.u32 %s0, 4
          %s189 = int_to_ptr.vmem [resolvable:$true] %s188
          %191 = dma.vmem_to_smem %s189, 32, [#allocation2], [#allocation4]
        $region16: #{tpu_custom_call.1} parent=11 // pred_fallthru
          _
        // Predicated region
        $region17: #{tpu_custom_call.1} parent=11 // pred_check
          %p192 = pneg %p97
        $region18: #{tpu_custom_call.1} parent=11 // pred_check_branch
          %194 = sbr.rel (%p192) target = $region20
        $region19: #{tpu_custom_call.1} parent=11 // pred_region
          _
        $region20: #{tpu_custom_call.1} parent=11 // pred_fallthru
          _
        // Predicated region
        $region21: #{tpu_custom_call.1} parent=11 // pred_check
          %p195 = pneg %p118
        $region22: #{tpu_custom_call.1} parent=11 // pred_check_branch
          %197 = sbr.rel (%p195) target = $region24
        $region23: #{tpu_custom_call.1} parent=11 // pred_region
          _
        $region24: #{tpu_custom_call.1} parent=11 // pred_fallthru
          _
        // Predicated region
        $region25: #{tpu_custom_call.1} parent=11 // pred_check
          %p198 = pneg %p139
        $region26: #{tpu_custom_call.1} parent=11 // pred_check_branch
          %200 = sbr.rel (%p198) target = $region28
        $region27: #{tpu_custom_call.1} parent=11 // pred_region
          _
        $region28: #{tpu_custom_call.1} parent=11 // pred_fallthru
          _
      $region12: #{tpu_custom_call.1} parent=5 // pred_fallthru
        _
      %p201 = scmp.lt.s32.totalorder %s15, 2
      // Predicated region
      $region29: #{tpu_custom_call.1} parent=5 // pred_check
        %p202 = pneg %p201
      $region30: #{tpu_custom_call.1} parent=5 // pred_check_branch
        %204 = sbr.rel (%p202) target = $region32
      $region31: #{tpu_custom_call.1} parent=5 // pred_region
        // Predicated region
        $region33: #{tpu_custom_call.1} parent=31 // pred_check
          %p205 = pneg %p70
        $region34: #{tpu_custom_call.1} parent=31 // pred_check_branch
          %207 = sbr.rel (%p205) target = $region36
        $region35: #{tpu_custom_call.1} parent=31 // pred_region
          %s208 = smul.u32 2, %s23
          %p209 = scmp.lt.s32.totalorder %s22, 1
          %s210 = scalar_select %p209, %s22, 1
          %p211 = scmp.lt.s32.totalorder %s208, 1
          %s212 = scalar_select %p211, %s208, 1
          %s213 = smul.addr %s210, 2
          %s214 = sadd.s32 %s212, %s213
          %s215 = smul.addr %s214, 4
          %s216 = scalar_lea.vmem %s1, %s215
          %s217 = smul.u32 2, %s23
        $region36: #{tpu_custom_call.1} parent=31 // pred_fallthru
          _
      $region32: #{tpu_custom_call.1} parent=5 // pred_fallthru
        _
      %p218 = scmp.le.s32.totalorder 1, %s15
      %p219 = scmp.lt.s32.totalorder %s15, 3
      %p220 = pnand %p218, %p219
      %p221 = pneg %p220
      // Predicated region
      $region37: #{tpu_custom_call.1} parent=5 // pred_check
        _
      $region38: #{tpu_custom_call.1} parent=5 // pred_check_branch
        %223 = sbr.rel (%p220) target = $region40
      $region39: #{tpu_custom_call.1} parent=5 // pred_region
        %s224 = ssub.s32 %s15, 1
        // Predicated region
        $region41: #{tpu_custom_call.1} parent=39 // pred_check
          %p225 = pneg %p48
        $region42: #{tpu_custom_call.1} parent=39 // pred_check_branch
          %227 = sbr.rel (%p225) target = $region44
        $region43: #{tpu_custom_call.1} parent=39 // pred_region
          %229 = dma.done [#allocation4], 32
        $region44: #{tpu_custom_call.1} parent=39 // pred_fallthru
          _
        %230 = sfence
        %p231 = pneg %p48
        %p232 = pneg %p45
        %s233 = smul.u32 2, %s25
        %p234 = scmp.lt.s32.totalorder %s24, 1
        %s235 = scalar_select %p234, %s24, 1
        %p236 = scmp.lt.s32.totalorder %s233, 1
        %s237 = scalar_select %p236, %s233, 1
        %s238 = smul.addr %s235, 2
        %s239 = sadd.s32 %s237, %s238
        %s240 = smul.addr %s239, 4
        %s241 = scalar_lea.vmem %s1, %s240
        %p242 = pneg %p76
        %p243 = pneg %p73
        %p244 = pneg %p97
        %p245 = pneg %p94
        %p246 = pneg %p118
        %p247 = pneg %p115
        %p248 = pneg %p139
        %p249 = pneg %p136
        %p250 = pneg %p167
        %p251 = pneg %p164
        %s252 = sand.u32 %s154, 1
        %s253 = scalar_lea.sflag [#allocation3], %s252
        %s254 = sand.u32 %s154, 1
        %s255 = smul.addr %s254, 8
        %s256 = scalar_lea.vmem [#allocation5], %s255
        %s257 = smul.u32 2, %s25
        %p258 = scmp.lt.s32.totalorder %s24, 1
        %s259 = scalar_select %p258, %s24, 1
        %p260 = scmp.lt.s32.totalorder %s257, 1
        %s261 = scalar_select %p260, %s257, 1
        %s262 = smul.addr %s259, 2
        %s263 = sadd.s32 %s261, %s262
        %s264 = smul.addr %s263, 4
        %s265 = scalar_lea.vmem %s1, %s264
        %s266 = smul.u32 2, %s25
        %s267 = smul.u32 2, %s25
        %s268 = smul.u32 %s24, 128
        %s269 = sld [smem:[#allocation2 + %s268]]
        %s270 = sadd.s32 %s268, 1
        %s271 = sld [smem:[#allocation2 + %s270]]
        %s272 = sadd.s32 %s268, 2
        %s273 = sld [smem:[#allocation2 + %s272]]
        %v274 = vld [vmem:[%s265] sm:$0xff]
        %v275 = vstv %s269
        %v276 = vmul.f32 %v274, %v275
        %v277 = vld [vmem:[%s2] sm:$0xff]
        %v278 = vld [vmem:[%s2 + $0x8] sm:$0xff]
        %v279 = vld [vmem:[%s2 + $0x10] sm:$0xff]
        %v280 = vld [vmem:[%s2 + $0x18] sm:$0xff]
        %v281 = vld [vmem:[%s4] sm:$0xff]
        %v282 = vld [vmem:[%s4 + $0x8] sm:$0xff]
        %v283 = vld [vmem:[%s4 + $0x10] sm:$0xff]
        %v284 = vld [vmem:[%s4 + $0x18] sm:$0xff]
        %v285 = vstv %s273
        %v286 = vmul.f32 %v285, %v281
        %v287 = vmul.f32 %v285, %v282
        %v288 = vmul.f32 %v285, %v283
        %v289 = vmul.f32 %v285, %v284
        %291 = vset.pattern.permute.xlu0 0
        %292 = vperm.xlu0 %291, %v286
        %v293 = vpop.permute.xlu0 %292
        %296 = vset.pattern.permute.xlu0 0
        %297 = vperm.xlu0 %296, %v287
        %v298 = vpop.permute.xlu0 %297
        %301 = vset.pattern.permute.xlu0 0
        %302 = vperm.xlu0 %301, %v288
        %v303 = vpop.permute.xlu0 %302
        %306 = vset.pattern.permute.xlu0 0
        %307 = vperm.xlu0 %306, %v289
        %v308 = vpop.permute.xlu0 %307
        %311 = vst [vmem:[#allocation1] ss:$2 sm:$0xff] %v276
        %v312 = vld.sshfl [vmem:[#allocation1] sm:$0xff pattern:$0x75316420]
        %v313 = vld.sshfl [vmem:[#allocation1 + $0x8] sm:$0xff pattern:$0x75316420]
        %vm314 = vcmask 31744
        %v316 = vsel %vm314, %v277, 0
        %v319 = vsel %vm314, %v278, 0
        %v322 = vsel %vm314, %v279, 0
        %v325 = vsel %vm314, %v280, 0
        %vm327 = vcmask 1043456
        %v328 = vsel %vm327, %v312, 0
        %v330 = vsel %vm327, %v313, 0
        %332 = vmatpush.msra.mxu0 0.0
        %333 = vmatpush.msra.mxu0 0.0
        %334 = vmatpush.msra.mxu0 0.0
        %335 = vmatpush.msra.mxu0 0.0
        %336 = vmatpush.msra.mxu0 0.0
        %337 = vmatpush.msra.mxu0 0.0
        %338 = vmatpush.msra.mxu0 0.0
        %339 = vmatpush.msra.mxu0 0.0
        %340 = vmatpush.msra.mxu0 0.0
        %341 = vmatpush.msra.mxu0 0.0
        %342 = vmatpush.msra.mxu0 0.0
        %343 = vmatpush.msra.mxu0 0.0
        %344 = vmatpush.msra.mxu0 0.0
        %345 = vmatpush.msra.mxu0 0.0
        %346 = vmatpush.msra.mxu0 0.0
        %347 = vmatpush.msra.mxu0 %v328
        %348 = vmatmul.f32.gmra.mxu0 %v316
        %v349 = vpop.f32.mrf.mxu0
        %v350 = vadd.f32 %v293, %v349
        %351 = vmatmul.f32.gmra.mxu0 %v319
        %v352 = vpop.f32.mrf.mxu0
        %v353 = vadd.f32 %v298, %v352
        %354 = vmatmul.f32.gmra.mxu0 %v322
        %v355 = vpop.f32.mrf.mxu0
        %v356 = vadd.f32 %v303, %v355
        %357 = vmatmul.f32.gmra.mxu0 %v325
        %v358 = vpop.f32.mrf.mxu0
        %v359 = vadd.f32 %v308, %v358
        %360 = vdwg.mxu0
        %361 = vmatpush.msra.mxu0 0.0
        %362 = vmatpush.msra.mxu0 0.0
        %363 = vmatpush.msra.mxu0 0.0
        %364 = vmatpush.msra.mxu0 0.0
        %365 = vmatpush.msra.mxu0 0.0
        %366 = vmatpush.msra.mxu0 0.0
        %367 = vmatpush.msra.mxu0 0.0
        %368 = vmatpush.msra.mxu0 0.0
        %369 = vmatpush.msra.mxu0 0.0
        %370 = vmatpush.msra.mxu0 0.0
        %371 = vmatpush.msra.mxu0 0.0
        %372 = vmatpush.msra.mxu0 0.0
        %373 = vmatpush.msra.mxu0 0.0
        %374 = vmatpush.msra.mxu0 0.0
        %375 = vmatpush.msra.mxu0 0.0
        %376 = vmatpush.msra.mxu0 %v330
        %377 = vmatmul.f32.gmra.mxu0 %v316
        %v378 = vpop.f32.mrf.mxu0
        %v379 = vadd.f32 %v293, %v378
        %380 = vmatmul.f32.gmra.mxu0 %v319
        %v381 = vpop.f32.mrf.mxu0
        %v382 = vadd.f32 %v298, %v381
        %383 = vmatmul.f32.gmra.mxu0 %v322
        %v384 = vpop.f32.mrf.mxu0
        %v385 = vadd.f32 %v303, %v384
        %386 = vmatmul.f32.gmra.mxu0 %v325
        %v387 = vpop.f32.mrf.mxu0
        %v388 = vadd.f32 %v308, %v387
        %389 = vdwg.mxu0
        %v390 = vmax.f32 %v350, 0.0
        %v391 = vmax.f32 %v379, 0.0
        %v392 = vmax.f32 %v353, 0.0
        %v393 = vmax.f32 %v382, 0.0
        %v394 = vmax.f32 %v356, 0.0
        %v395 = vmax.f32 %v385, 0.0
        %v396 = vmax.f32 %v359, 0.0
        %v397 = vmax.f32 %v388, 0.0
        %v398 = vld [vmem:[%s3] sm:$0xf]
        %vm399 = vcmask 261120
        %v401 = vsel %vm399, %v398, 0
        %403 = vmatpush.msra.mxu0 0.0
        %404 = vmatpush.msra.mxu0 0.0
        %405 = vmatpush.msra.mxu0 0.0
        %406 = vmatpush.msra.mxu0 0.0
        %407 = vmatpush.msra.mxu0 0.0
        %408 = vmatpush.msra.mxu0 0.0
        %409 = vmatpush.msra.mxu0 0.0
        %410 = vmatpush.msra.mxu0 0.0
        %411 = vmatpush.msra.mxu0 0.0
        %412 = vmatpush.msra.mxu0 0.0
        %413 = vmatpush.msra.mxu0 0.0
        %414 = vmatpush.msra.mxu0 0.0
        %415 = vmatpush.msra.mxu0 %v396
        %416 = vmatpush.msra.mxu0 %v394
        %417 = vmatpush.msra.mxu0 %v392
        %418 = vmatpush.msra.mxu0 %v390
        %419 = vmatmul.f32.gmra.mxu0 %v401
        %v420 = vpop.f32.mrf.mxu0
        %v421 = vadd.f32 0.0, %v420
        %422 = vdwg.mxu0
        %423 = vmatpush.msra.mxu0 0.0
        %424 = vmatpush.msra.mxu0 0.0
        %425 = vmatpush.msra.mxu0 0.0
        %426 = vmatpush.msra.mxu0 0.0
        %427 = vmatpush.msra.mxu0 0.0
        %428 = vmatpush.msra.mxu0 0.0
        %429 = vmatpush.msra.mxu0 0.0
        %430 = vmatpush.msra.mxu0 0.0
        %431 = vmatpush.msra.mxu0 0.0
        %432 = vmatpush.msra.mxu0 0.0
        %433 = vmatpush.msra.mxu0 0.0
        %434 = vmatpush.msra.mxu0 0.0
        %435 = vmatpush.msra.mxu0 %v397
        %436 = vmatpush.msra.mxu0 %v395
        %437 = vmatpush.msra.mxu0 %v393
        %438 = vmatpush.msra.mxu0 %v391
        %439 = vmatmul.f32.gmra.mxu0 %v401
        %v440 = vpop.f32.mrf.mxu0
        %v441 = vadd.f32 0.0, %v440
        %442 = vdwg.mxu0
        %v443 = vstv %s271
        %v444 = vmul.f32 %v421, %v443
        %v445 = vmul.f32 %v441, %v443
        %v448 = vrot.slane %v445, 4
        %v449 = vsel %vm327, %v444, %v448
        %v451 = vadd.f32 %v274, %v449
        %452 = vst [vmem:[%s256] sm:$0xff] %v451
        %s453 = sand.u32 %s154, 1
        %s454 = scalar_lea.sflag [#allocation3], %s453
        %s455 = sand.u32 %s154, 1
        %s456 = smul.addr %s455, 8
        %s457 = scalar_lea.vmem [#allocation5], %s456
        // Predicated region
        $region45: #{tpu_custom_call.1} parent=39 // pred_check
          %p458 = pneg %p164
        $region46: #{tpu_custom_call.1} parent=39 // pred_check_branch
          %460 = sbr.rel (%p458) target = $region48
        $region47: #{tpu_custom_call.1} parent=39 // pred_region
          %s461 = smul.u32 2, %s25
          %463 = vsyncadd %s454, 0
          %s464 = smul.addr %s24, 2
          %s465 = sadd.s32 %s461, %s464
          %s466 = smul.addr %s465, 4
          %s467 = scalar_lea.hbm %s5, %s466
          %s469 = sshll.u32 %s457, 4
          %s470 = int_to_ptr.vmem [resolvable:$true] %s469
          %s471 = sshll.u32 %s467, 4
          %s472 = int_to_ptr.hbm [resolvable:$true] %s471
          %474 = dma.vmem_to_hbm [thread:$0]  %s470, 128, %s472, %s454
        $region48: #{tpu_custom_call.1} parent=39 // pred_fallthru
          _
      $region40: #{tpu_custom_call.1} parent=5 // pred_fallthru
        _
      %p475 = scmp.le.s32.totalorder 2, %s15
      // Predicated region
      $region49: #{tpu_custom_call.1} parent=5 // pred_check
        %p476 = pneg %p475
      $region50: #{tpu_custom_call.1} parent=5 // pred_check_branch
        %478 = sbr.rel (%p476) target = $region52
      $region51: #{tpu_custom_call.1} parent=5 // pred_region
        %s479 = ssub.s32 %s15, 2
        // Predicated region
        $region53: #{tpu_custom_call.1} parent=51 // pred_check
          %p480 = pneg %p170
        $region54: #{tpu_custom_call.1} parent=51 // pred_check_branch
          %482 = sbr.rel (%p480) target = $region56
        $region55: #{tpu_custom_call.1} parent=51 // pred_region
          %s483 = sand.u32 %s155, 1
          %s484 = scalar_lea.sflag [#allocation3], %s483
          %s485 = sand.u32 %s155, 1
          %s486 = smul.addr %s485, 8
          %s487 = scalar_lea.vmem [#allocation5], %s486
          %489 = dma.done %s484, 128
        $region56: #{tpu_custom_call.1} parent=51 // pred_fallthru
          _
      $region52: #{tpu_custom_call.1} parent=5 // pred_fallthru
        _
    $region6: #{tpu_custom_call.1} parent=1 // loop_footer
      %s19 = sadd.s32 1, %s15
    $region7: #{tpu_custom_call.1} parent=1 // loop_footer_branch
      %14 = sbr.rel target = $region3
    $region8: #{tpu_custom_call.1} parent=1 // loop_exit
      _
    %490 = vsyncpa [#allocation3], 1
    %s491 = scalar_lea.sflag [#allocation3], 1
    %492 = vsyncpa %s491, 1
    %493 = vsyncpa [#allocation4], 1
    %s494 = scalar_lea.sflag [#allocation4], 1
    %495 = vsyncpa %s494, 1

</llo_original>
